<compile_context>
chip_gen: v5e
topology: v5e:2x2
jax: 0.10.0
libtpu: 0.0.40
codegen_flags: <defaults>
</compile_context>

<pallas_src>
import functools

import numpy as np
import jax
import jax.numpy as jnp
from jax.experimental import pallas as pl
from jax.experimental.pallas import tpu as pltpu


def _round_up(x, m):
    return ((x + m - 1) // m) * m


def _tile_code_onehot_kernel(x_ref, out_ref, *, boundaries, base, tn, out_dtype):
    """x_ref: (tb, dim) f32; out_ref: (tb, tn) out_dtype (one class tile)."""
    tb, dim = x_ref.shape
    code = jnp.zeros((tb, 1), dtype=jnp.int32)
    # dim and bins are tiny and static -> fully unrolled scalar-immediate
    # compares on the VPU (no XLU reductions, no boundary DMA).
    for d in range(dim):
        xd = x_ref[:, d:d + 1]                                  # (tb, 1)
        digit = jnp.zeros((tb, 1), dtype=jnp.int32)
        for b in boundaries[d]:                                 # Python float immediates
            digit = digit + (xd > b).astype(jnp.int32)
        code = code * base + digit                              # Horner in base (bins+1)
    j = pl.program_id(1)                                        # class-tile index
    iota = jax.lax.broadcasted_iota(jnp.int32, (tb, tn), 1) + j * tn
    out_ref[...] = (iota == code).astype(out_dtype)


def _tile_code_int_kernel(x_ref, out_ref, *, boundaries, base):
    """x_ref: (dim, tl) f32 (batch along lanes); out_ref: (1, tl) i32 (lane-dense)."""
    dim, tl = x_ref.shape
    code = jnp.zeros((1, tl), dtype=jnp.int32)
    for d in range(dim):
        xd = x_ref[d:d + 1, :]                                  # (1, tl)
        digit = jnp.zeros((1, tl), dtype=jnp.int32)
        for b in boundaries[d]:
            digit = digit + (xd > b).astype(jnp.int32)
        code = code * base + digit
    out_ref[...] = code


class TileCodePallas:
    """JAX/Pallas port of rllib TileCode (deterministic, no learned params)."""

    def __init__(self, low, high, bins, one_hot=True, *,
                 out_dtype=jnp.float32, block_rows=256, block_cols=4096,
                 block_lanes=2048):
        low = np.asarray(low, dtype=np.float64)
        high = np.asarray(high, dtype=np.float64)
        assert len(low) == len(high)
        self.dim = len(low)
        self.bins = int(bins)
        self.base = self.bins + 1
        num_outputs = self.base ** self.dim
        # int32 code / iota arithmetic inside the kernel.
        assert num_outputs < 2 ** 31, (
            "num_outputs = (bins+1)^dim must fit in int32")
        self.num_outputs = num_outputs
        self.one_hot = one_hot
        self.out_dtype = out_dtype                  # torch returns float32 one-hots
        self.block_rows = _round_up(max(int(block_rows), 8), 8)
        self.block_cols = _round_up(max(int(block_cols), 128), 128)
        self.block_lanes = _round_up(max(int(block_lanes), 128), 128)

        # Same boundary construction as the torch module:
        #   linspace(low, high, bins+1)[1:] - (high - low) / (2 * bins)
        tiles = np.stack(
            [np.linspace(l, h, self.bins + 1)[1:] - (h - l) / (2 * self.bins)
             for l, h in zip(low, high)],
            axis=-1,
        ).astype(np.float32)                        # (bins, dim)
        self.tiles = jnp.asarray(tiles)             # kept for the reference check
        # Compile-time constant boundaries, per dimension (tuple of tuples of floats).
        self.boundaries = tuple(
            tuple(float(tiles[k, d]) for k in range(self.bins))
            for d in range(self.dim)
        )

    # ------------------------------------------------------------------ #
    def _forward_one_hot(self, x):
        B, dim = x.shape
        N = self.num_outputs

        # Batch tile: multiple of 8 sublanes.
        tb = min(self.block_rows, _round_up(B, 8))
        B_pad = _round_up(B, tb)
        # Class tile: large multiple of 128 lanes (unmasked, lane-dense stores).
        N_ru = _round_up(N, 128)
        tn = min(self.block_cols, N_ru)
        N_pad = _round_up(N, tn)

        if B_pad != B:
            x = jnp.pad(x, ((0, B_pad - B), (0, 0)))

        kernel = functools.partial(
            _tile_code_onehot_kernel,
            boundaries=self.boundaries, base=self.base,
            tn=tn, out_dtype=self.out_dtype,
        )

        out_itemsize = jnp.dtype(self.out_dtype).itemsize
        # Double-buffered output block + double-buffered x block + headroom.
        vmem_limit = 2 * tb * tn * out_itemsize + 2 * tb * dim * 4 + (2 << 20)
        vmem_limit = int(max(vmem_limit, 16 << 20))

        out = pl.pallas_call(
            kernel,
            out_shape=jax.ShapeDtypeStruct((B_pad, N_pad), self.out_dtype),
            grid=(B_pad // tb, N_pad // tn),
            in_specs=[pl.BlockSpec((tb, dim), lambda i, j: (i, 0))],
            out_specs=pl.BlockSpec((tb, tn), lambda i, j: (i, j)),
            compiler_params=pltpu.CompilerParams(
                dimension_semantics=("parallel", "parallel"),
                vmem_limit_bytes=vmem_limit,
            ),
        )(x)
        return out[:B, :N]

    def _forward_int(self, x):
        B, dim = x.shape
        # Batch along lanes -> lane-dense int32 code stores.
        tl = min(self.block_lanes, _round_up(B, 128))
        B_pad = _round_up(B, tl)

        x_t = x.T                                    # (dim, B)
        if B_pad != B:
            x_t = jnp.pad(x_t, ((0, 0), (0, B_pad - B)))

        kernel = functools.partial(
            _tile_code_int_kernel, boundaries=self.boundaries, base=self.base,
        )

        out = pl.pallas_call(
            kernel,
            out_shape=jax.ShapeDtypeStruct((1, B_pad), jnp.int32),
            grid=(B_pad // tl,),
            in_specs=[pl.BlockSpec((dim, tl), lambda i: (0, i))],
            out_specs=pl.BlockSpec((1, tl), lambda i: (0, i)),
            compiler_params=pltpu.CompilerParams(
                dimension_semantics=("parallel",),
                vmem_limit_bytes=16 << 20,
            ),
        )(x_t)
        return out[0, :B]                            # (B,) int32 codes

    # ------------------------------------------------------------------ #
    def __call__(self, x):
        x = jnp.asarray(x, dtype=jnp.float32)
        assert x.ndim == 2 and x.shape[1] == self.dim, (
            "expected x of shape (batch, dim)")
        if self.one_hot:
            return self._forward_one_hot(x)
        return self._forward_int(x)


def _reference_forward(x, tiles, bins, one_hot):
    """Pure-JAX reference (mirrors digitize + _tuple_to_int + one_hot_encode)."""
    digits = jnp.sum(
        (x[:, None, :] > tiles[None, :, :]).astype(jnp.int32), axis=1
    )  # (B, dim)
    dim = x.shape[-1]
    code = digits[:, 0]
    for d in range(1, dim):
        code = code * (bins + 1) + digits[:, d]
    if one_hot:
        return jax.nn.one_hot(code, (bins + 1) ** dim, dtype=jnp.float32)
    return code


if __name__ == "__main__":
    key = jax.random.PRNGKey(0)

    # --- Test 1: small deterministic case (2-D, 15 bins -> 256 classes) ----
    low, high, bins, batch = [-1.0, -1.0], [1.0, 1.0], 15, 8
    tc = TileCodePallas(low, high, bins, one_hot=True)
    x = jax.random.uniform(key, (batch, len(low)), dtype=jnp.float32,
                           minval=-1.2, maxval=1.2)
    out = jax.block_until_ready(tc(x))
    ref = _reference_forward(x, tc.tiles, bins, one_hot=True)
    np.testing.assert_allclose(np.asarray(out), np.asarray(ref), atol=0, rtol=0)
    assert out.shape == (batch, tc.num_outputs) and out.dtype == jnp.float32

    tc_int = TileCodePallas(low, high, bins, one_hot=False)
    code = jax.block_until_ready(tc_int(x))
    ref_code = _reference_forward(x, tc.tiles, bins, one_hot=False)
    np.testing.assert_array_equal(np.asarray(code), np.asarray(ref_code))

    # --- Test 2: exercise batch padding + multi-tile 2-D grid --------------
    batch2 = 200  # pads to 256 rows with block_rows=64 -> 4 x 2 grid
    tc2 = TileCodePallas(low, high, bins, one_hot=True,
                         block_rows=64, block_cols=128)
    x2 = jax.random.uniform(jax.random.PRNGKey(1), (batch2, len(low)),
                            dtype=jnp.float32, minval=-1.5, maxval=1.5)
    out2 = jax.block_until_ready(tc2(x2))
    ref2 = _reference_forward(x2, tc2.tiles, bins, one_hot=True)
    np.testing.assert_allclose(np.asarray(out2), np.asarray(ref2), atol=0, rtol=0)

    tc2_int = TileCodePallas(low, high, bins, one_hot=False, block_lanes=128)
    code2 = jax.block_until_ready(tc2_int(x2))
    ref_code2 = _reference_forward(x2, tc2.tiles, bins, one_hot=False)
    np.testing.assert_array_equal(np.asarray(code2), np.asarray(ref_code2))

    print("KERNEL_OK")
</pallas_src>

<mosaic_0001>
module attributes {stable_mosaic.version = 11 : i64} {
  func.func @_tile_code_onehot_kernel(%arg0: i32, %arg1: i32, %arg2: memref<8x2xf32, #tpu.memory_space<vmem>>, %arg3: memref<8x256xf32, #tpu.memory_space<vmem>>) attributes {dimension_semantics = [#tpu.dimension_semantics<parallel>, #tpu.dimension_semantics<parallel>], iteration_bounds = array<i64: 1, 1>, scalar_prefetch = 0 : i64, scratch_operands = 0 : i64, tpu.core_type = #tpu.core_type<tc>, window_params = [{transform_indices = @transform_0, window_bounds = array<i64: 8, 2>}, {transform_indices = @transform_1, window_bounds = array<i64: 8, 256>}]} {
    %c0_i32 = arith.constant 0 : i32
    %0 = vector.broadcast %c0_i32 : i32 to vector<8x1xi32>
    %c0 = arith.constant 0 : index
    %c0_0 = arith.constant 0 : index
    %1 = vector.load %arg2[%c0, %c0_0] : memref<8x2xf32, #tpu.memory_space<vmem>>, vector<8x1xf32>
    %c0_i32_1 = arith.constant 0 : i32
    %2 = vector.broadcast %c0_i32_1 : i32 to vector<8x1xi32>
    %cst = arith.constant -0.933333337 : f32
    %3 = vector.broadcast %cst : f32 to vector<8x1xf32>
    %4 = arith.cmpf ogt, %1, %3 : vector<8x1xf32>
    %5 = arith.extui %4 : vector<8x1xi1> to vector<8x1xi32>
    %6 = arith.addi %2, %5 : vector<8x1xi32>
    %cst_2 = arith.constant -8.000000e-01 : f32
    %7 = vector.broadcast %cst_2 : f32 to vector<8x1xf32>
    %8 = arith.cmpf ogt, %1, %7 : vector<8x1xf32>
    %9 = arith.extui %8 : vector<8x1xi1> to vector<8x1xi32>
    %10 = arith.addi %6, %9 : vector<8x1xi32>
    %cst_3 = arith.constant -0.666666686 : f32
    %11 = vector.broadcast %cst_3 : f32 to vector<8x1xf32>
    %12 = arith.cmpf ogt, %1, %11 : vector<8x1xf32>
    %13 = arith.extui %12 : vector<8x1xi1> to vector<8x1xi32>
    %14 = arith.addi %10, %13 : vector<8x1xi32>
    %cst_4 = arith.constant -0.533333361 : f32
    %15 = vector.broadcast %cst_4 : f32 to vector<8x1xf32>
    %16 = arith.cmpf ogt, %1, %15 : vector<8x1xf32>
    %17 = arith.extui %16 : vector<8x1xi1> to vector<8x1xi32>
    %18 = arith.addi %14, %17 : vector<8x1xi32>
    %cst_5 = arith.constant -4.000000e-01 : f32
    %19 = vector.broadcast %cst_5 : f32 to vector<8x1xf32>
    %20 = arith.cmpf ogt, %1, %19 : vector<8x1xf32>
    %21 = arith.extui %20 : vector<8x1xi1> to vector<8x1xi32>
    %22 = arith.addi %18, %21 : vector<8x1xi32>
    %cst_6 = arith.constant -0.266666681 : f32
    %23 = vector.broadcast %cst_6 : f32 to vector<8x1xf32>
    %24 = arith.cmpf ogt, %1, %23 : vector<8x1xf32>
    %25 = arith.extui %24 : vector<8x1xi1> to vector<8x1xi32>
    %26 = arith.addi %22, %25 : vector<8x1xi32>
    %cst_7 = arith.constant -0.13333334 : f32
    %27 = vector.broadcast %cst_7 : f32 to vector<8x1xf32>
    %28 = arith.cmpf ogt, %1, %27 : vector<8x1xf32>
    %29 = arith.extui %28 : vector<8x1xi1> to vector<8x1xi32>
    %30 = arith.addi %26, %29 : vector<8x1xi32>
    %cst_8 = arith.constant -1.38777878E-17 : f32
    %31 = vector.broadcast %cst_8 : f32 to vector<8x1xf32>
    %32 = arith.cmpf ogt, %1, %31 : vector<8x1xf32>
    %33 = arith.extui %32 : vector<8x1xi1> to vector<8x1xi32>
    %34 = arith.addi %30, %33 : vector<8x1xi32>
    %cst_9 = arith.constant 0.13333334 : f32
    %35 = vector.broadcast %cst_9 : f32 to vector<8x1xf32>
    %36 = arith.cmpf ogt, %1, %35 : vector<8x1xf32>
    %37 = arith.extui %36 : vector<8x1xi1> to vector<8x1xi32>
    %38 = arith.addi %34, %37 : vector<8x1xi32>
    %cst_10 = arith.constant 0.266666681 : f32
    %39 = vector.broadcast %cst_10 : f32 to vector<8x1xf32>
    %40 = arith.cmpf ogt, %1, %39 : vector<8x1xf32>
    %41 = arith.extui %40 : vector<8x1xi1> to vector<8x1xi32>
    %42 = arith.addi %38, %41 : vector<8x1xi32>
    %cst_11 = arith.constant 4.000000e-01 : f32
    %43 = vector.broadcast %cst_11 : f32 to vector<8x1xf32>
    %44 = arith.cmpf ogt, %1, %43 : vector<8x1xf32>
    %45 = arith.extui %44 : vector<8x1xi1> to vector<8x1xi32>
    %46 = arith.addi %42, %45 : vector<8x1xi32>
    %cst_12 = arith.constant 0.533333361 : f32
    %47 = vector.broadcast %cst_12 : f32 to vector<8x1xf32>
    %48 = arith.cmpf ogt, %1, %47 : vector<8x1xf32>
    %49 = arith.extui %48 : vector<8x1xi1> to vector<8x1xi32>
    %50 = arith.addi %46, %49 : vector<8x1xi32>
    %cst_13 = arith.constant 0.666666686 : f32
    %51 = vector.broadcast %cst_13 : f32 to vector<8x1xf32>
    %52 = arith.cmpf ogt, %1, %51 : vector<8x1xf32>
    %53 = arith.extui %52 : vector<8x1xi1> to vector<8x1xi32>
    %54 = arith.addi %50, %53 : vector<8x1xi32>
    %cst_14 = arith.constant 8.000000e-01 : f32
    %55 = vector.broadcast %cst_14 : f32 to vector<8x1xf32>
    %56 = arith.cmpf ogt, %1, %55 : vector<8x1xf32>
    %57 = arith.extui %56 : vector<8x1xi1> to vector<8x1xi32>
    %58 = arith.addi %54, %57 : vector<8x1xi32>
    %cst_15 = arith.constant 0.933333337 : f32
    %59 = vector.broadcast %cst_15 : f32 to vector<8x1xf32>
    %60 = arith.cmpf ogt, %1, %59 : vector<8x1xf32>
    %61 = arith.extui %60 : vector<8x1xi1> to vector<8x1xi32>
    %62 = arith.addi %58, %61 : vector<8x1xi32>
    %c16_i32 = arith.constant 16 : i32
    %63 = vector.broadcast %c16_i32 : i32 to vector<8x1xi32>
    %64 = arith.muli %0, %63 : vector<8x1xi32>
    %65 = arith.addi %64, %62 : vector<8x1xi32>
    %c0_16 = arith.constant 0 : index
    %c1 = arith.constant 1 : index
    %66 = vector.load %arg2[%c0_16, %c1] : memref<8x2xf32, #tpu.memory_space<vmem>>, vector<8x1xf32>
    %c0_i32_17 = arith.constant 0 : i32
    %67 = vector.broadcast %c0_i32_17 : i32 to vector<8x1xi32>
    %cst_18 = arith.constant -0.933333337 : f32
    %68 = vector.broadcast %cst_18 : f32 to vector<8x1xf32>
    %69 = arith.cmpf ogt, %66, %68 : vector<8x1xf32>
    %70 = arith.extui %69 : vector<8x1xi1> to vector<8x1xi32>
    %71 = arith.addi %67, %70 : vector<8x1xi32>
    %cst_19 = arith.constant -8.000000e-01 : f32
    %72 = vector.broadcast %cst_19 : f32 to vector<8x1xf32>
    %73 = arith.cmpf ogt, %66, %72 : vector<8x1xf32>
    %74 = arith.extui %73 : vector<8x1xi1> to vector<8x1xi32>
    %75 = arith.addi %71, %74 : vector<8x1xi32>
    %cst_20 = arith.constant -0.666666686 : f32
    %76 = vector.broadcast %cst_20 : f32 to vector<8x1xf32>
    %77 = arith.cmpf ogt, %66, %76 : vector<8x1xf32>
    %78 = arith.extui %77 : vector<8x1xi1> to vector<8x1xi32>
    %79 = arith.addi %75, %78 : vector<8x1xi32>
    %cst_21 = arith.constant -0.533333361 : f32
    %80 = vector.broadcast %cst_21 : f32 to vector<8x1xf32>
    %81 = arith.cmpf ogt, %66, %80 : vector<8x1xf32>
    %82 = arith.extui %81 : vector<8x1xi1> to vector<8x1xi32>
    %83 = arith.addi %79, %82 : vector<8x1xi32>
    %cst_22 = arith.constant -4.000000e-01 : f32
    %84 = vector.broadcast %cst_22 : f32 to vector<8x1xf32>
    %85 = arith.cmpf ogt, %66, %84 : vector<8x1xf32>
    %86 = arith.extui %85 : vector<8x1xi1> to vector<8x1xi32>
    %87 = arith.addi %83, %86 : vector<8x1xi32>
    %cst_23 = arith.constant -0.266666681 : f32
    %88 = vector.broadcast %cst_23 : f32 to vector<8x1xf32>
    %89 = arith.cmpf ogt, %66, %88 : vector<8x1xf32>
    %90 = arith.extui %89 : vector<8x1xi1> to vector<8x1xi32>
    %91 = arith.addi %87, %90 : vector<8x1xi32>
    %cst_24 = arith.constant -0.13333334 : f32
    %92 = vector.broadcast %cst_24 : f32 to vector<8x1xf32>
    %93 = arith.cmpf ogt, %66, %92 : vector<8x1xf32>
    %94 = arith.extui %93 : vector<8x1xi1> to vector<8x1xi32>
    %95 = arith.addi %91, %94 : vector<8x1xi32>
    %cst_25 = arith.constant -1.38777878E-17 : f32
    %96 = vector.broadcast %cst_25 : f32 to vector<8x1xf32>
    %97 = arith.cmpf ogt, %66, %96 : vector<8x1xf32>
    %98 = arith.extui %97 : vector<8x1xi1> to vector<8x1xi32>
    %99 = arith.addi %95, %98 : vector<8x1xi32>
    %cst_26 = arith.constant 0.13333334 : f32
    %100 = vector.broadcast %cst_26 : f32 to vector<8x1xf32>
    %101 = arith.cmpf ogt, %66, %100 : vector<8x1xf32>
    %102 = arith.extui %101 : vector<8x1xi1> to vector<8x1xi32>
    %103 = arith.addi %99, %102 : vector<8x1xi32>
    %cst_27 = arith.constant 0.266666681 : f32
    %104 = vector.broadcast %cst_27 : f32 to vector<8x1xf32>
    %105 = arith.cmpf ogt, %66, %104 : vector<8x1xf32>
    %106 = arith.extui %105 : vector<8x1xi1> to vector<8x1xi32>
    %107 = arith.addi %103, %106 : vector<8x1xi32>
    %cst_28 = arith.constant 4.000000e-01 : f32
    %108 = vector.broadcast %cst_28 : f32 to vector<8x1xf32>
    %109 = arith.cmpf ogt, %66, %108 : vector<8x1xf32>
    %110 = arith.extui %109 : vector<8x1xi1> to vector<8x1xi32>
    %111 = arith.addi %107, %110 : vector<8x1xi32>
    %cst_29 = arith.constant 0.533333361 : f32
    %112 = vector.broadcast %cst_29 : f32 to vector<8x1xf32>
    %113 = arith.cmpf ogt, %66, %112 : vector<8x1xf32>
    %114 = arith.extui %113 : vector<8x1xi1> to vector<8x1xi32>
    %115 = arith.addi %111, %114 : vector<8x1xi32>
    %cst_30 = arith.constant 0.666666686 : f32
    %116 = vector.broadcast %cst_30 : f32 to vector<8x1xf32>
    %117 = arith.cmpf ogt, %66, %116 : vector<8x1xf32>
    %118 = arith.extui %117 : vector<8x1xi1> to vector<8x1xi32>
    %119 = arith.addi %115, %118 : vector<8x1xi32>
    %cst_31 = arith.constant 8.000000e-01 : f32
    %120 = vector.broadcast %cst_31 : f32 to vector<8x1xf32>
    %121 = arith.cmpf ogt, %66, %120 : vector<8x1xf32>
    %122 = arith.extui %121 : vector<8x1xi1> to vector<8x1xi32>
    %123 = arith.addi %119, %122 : vector<8x1xi32>
    %cst_32 = arith.constant 0.933333337 : f32
    %124 = vector.broadcast %cst_32 : f32 to vector<8x1xf32>
    %125 = arith.cmpf ogt, %66, %124 : vector<8x1xf32>
    %126 = arith.extui %125 : vector<8x1xi1> to vector<8x1xi32>
    %127 = arith.addi %123, %126 : vector<8x1xi32>
    %c16_i32_33 = arith.constant 16 : i32
    %128 = vector.broadcast %c16_i32_33 : i32 to vector<8x1xi32>
    %129 = arith.muli %65, %128 : vector<8x1xi32>
    %130 = arith.addi %129, %127 : vector<8x1xi32>
    %131 = tpu.iota {dimensions = array<i32: 1>} : vector<8x256xi32>
    %c256_i32 = arith.constant 256 : i32
    %132 = arith.muli %arg1, %c256_i32 : i32
    %133 = vector.broadcast %132 : i32 to vector<8x256xi32>
    %134 = arith.addi %131, %133 : vector<8x256xi32>
    %135 = vector.broadcast %130 : vector<8x1xi32> to vector<8x256xi32>
    %136 = arith.cmpi eq, %134, %135 : vector<8x256xi32>
    %137 = arith.extui %136 : vector<8x256xi1> to vector<8x256xi32>
    %138 = arith.sitofp %137 : vector<8x256xi32> to vector<8x256xf32>
    %c0_34 = arith.constant 0 : index
    %c0_35 = arith.constant 0 : index
    %139 = vector.load %arg3[%c0_34, %c0_35] : memref<8x256xf32, #tpu.memory_space<vmem>>, vector<8x256xf32>
    tpu.vector_store %arg3[%c0_34, %c0_35], %138 {strides = array<i32>} : memref<8x256xf32, #tpu.memory_space<vmem>>, vector<8x256xf32>,
    return
  }
  func.func @transform_0(%arg0: i32, %arg1: i32) -> (i32, i32) {
    %c0_i32 = arith.constant 0 : i32
    %c0_i32_0 = arith.constant 0 : i32
    return %arg0, %c0_i32 : i32, i32
  }
  func.func @transform_1(%arg0: i32, %arg1: i32) -> (i32, i32) {
    %c0_i32 = arith.constant 0 : i32
    return %arg0, %arg1 : i32, i32
  }
}

</mosaic_0001>

<llo_original>
// kernel: tpu_custom_call.1
$region0: #{tpu_custom_call.1}
  #allocation0 [shape = 'u32[]', space=smem, size = 0x4, offset = 0x4, fixed_abs, tag = 'smem constant byte address 0x4 - core index']
  #allocation1 [shape = 'u32[72,128]{1,0:T(1,128)}', space=vmem, size = 0x9000, scoped, tag = 'internal scratch']
  %s0 = inlined_call_operand.vmem [shape: f32[8,2], index: 0, kind: input, shape index: {}]
  %s1 = inlined_call_operand.hbm [shape: f32[8,256], index: 1, kind: output, shape index: {}]
  %s2 = sld [smem:[#allocation0]]
  $region14: #{tpu_custom_call.1} parent=0
    _
  %s4 = ssub.s32 1, %s2
  %s5 = scalar_select 0, %s4, %s2
  $region1: #{tpu_custom_call.1} parent=0
    #allocation2 [shape = 'u8[8192]{0}', space=vmem, size = 0x2000, scoped, tag = 'output window, operand 0, single buffered']
    #allocation3 [shape = 's32[1]{0}', space=sflag, size = 0x4, scoped, tag = 'scoped memory for tpu_custom_call.1']
    %6 = vsyncpa [#allocation3], 0
    // Predicated region
    $region2: #{tpu_custom_call.1} parent=1 // pred_check
      _
    $region3: #{tpu_custom_call.1} parent=1 // pred_check_branch
      %8 = sbr.rel (0) target = $region5
    $region4: #{tpu_custom_call.1} parent=1 // pred_region
      _
    $region5: #{tpu_custom_call.1} parent=1 // pred_fallthru
      _
    %v9 = vld [vmem:[%s0] sm:$0xff]
    %vm10 = vcmp.gt.f32.partialorder %v9, -0.93333334
    %v11 = vsel %vm10, 1, 0
    %vm12 = vcmp.gt.f32.partialorder %v9, -0.8
    %v13 = vsel %vm12, 1, 0
    %v14 = vadd.s32 %v11, %v13
    %vm15 = vcmp.gt.f32.partialorder %v9, -0.6666667
    %v16 = vsel %vm15, 1, 0
    %v17 = vadd.s32 %v14, %v16
    %vm18 = vcmp.gt.f32.partialorder %v9, -0.53333336
    %v19 = vsel %vm18, 1, 0
    %v20 = vadd.s32 %v17, %v19
    %vm21 = vcmp.gt.f32.partialorder %v9, -0.4
    %v22 = vsel %vm21, 1, 0
    %v23 = vadd.s32 %v20, %v22
    %vm24 = vcmp.gt.f32.partialorder %v9, -0.26666668
    %v25 = vsel %vm24, 1, 0
    %v26 = vadd.s32 %v23, %v25
    %vm27 = vcmp.gt.f32.partialorder %v9, -0.13333334
    %v28 = vsel %vm27, 1, 0
    %v29 = vadd.s32 %v26, %v28
    %vm30 = vcmp.gt.f32.partialorder %v9, -1.3877788e-17
    %v31 = vsel %vm30, 1, 0
    %v32 = vadd.s32 %v29, %v31
    %vm33 = vcmp.gt.f32.partialorder %v9, 0.13333334
    %v34 = vsel %vm33, 1, 0
    %v35 = vadd.s32 %v32, %v34
    %vm36 = vcmp.gt.f32.partialorder %v9, 0.26666668
    %v37 = vsel %vm36, 1, 0
    %v38 = vadd.s32 %v35, %v37
    %vm39 = vcmp.gt.f32.partialorder %v9, 0.4
    %v40 = vsel %vm39, 1, 0
    %v41 = vadd.s32 %v38, %v40
    %vm42 = vcmp.gt.f32.partialorder %v9, 0.53333336
    %v43 = vsel %vm42, 1, 0
    %v44 = vadd.s32 %v41, %v43
    %vm45 = vcmp.gt.f32.partialorder %v9, 0.6666667
    %v46 = vsel %vm45, 1, 0
    %v47 = vadd.s32 %v44, %v46
    %vm48 = vcmp.gt.f32.partialorder %v9, 0.8
    %v49 = vsel %vm48, 1, 0
    %v50 = vadd.s32 %v47, %v49
    %vm51 = vcmp.gt.f32.partialorder %v9, 0.93333334
    %v52 = vsel %vm51, 1, 0
    %v53 = vadd.s32 %v50, %v52
    %v54 = vmul.u32 %v53, 16
    %55 = vrot.lane.b32.xlu0 %v53, 127
    %v56 = vpop.permute.xlu0 %55
    %v57 = vadd.s32 %v54, %v56
    %v58 = vlaneseq
    %v59 = vand.u32 %v58, 127
    %v60 = vadd.s32 %v59, 128
    %s61 = smul.u32 0, 256
    %v62 = vstv %s61
    %v63 = vadd.s32 %v59, %v62
    %v64 = vadd.s32 %v60, %v62
    %65 = vset.pattern.permute.xlu0 0
    %66 = vperm.xlu0 %65, %v57
    %v67 = vpop.permute.xlu0 %66
    %vm68 = vcmp.eq.s32.totalorder %v63, %v67
    %vm69 = vcmp.eq.s32.totalorder %v64, %v67
    %v70 = vsel %vm68, 1, 0
    %v71 = vsel %vm69, 1, 0
    %v72 = vcvt.s32.f32 %v70
    %v73 = vcvt.s32.f32 %v71
    %74 = vst [vmem:[#allocation2] sm:$0xff] %v72
    %75 = vst [vmem:[#allocation2 + $0x8] sm:$0xff] %v73
    // Predicated region
    $region6: #{tpu_custom_call.1} parent=1 // pred_check
      _
    $region7: #{tpu_custom_call.1} parent=1 // pred_check_branch
      %77 = sbr.rel (0) target = $region9
    $region8: #{tpu_custom_call.1} parent=1 // pred_region
      %79 = vsyncadd [#allocation3], 0
      %s81 = sshll.u32 [#allocation2], 4
      %s82 = int_to_ptr.vmem [resolvable:$true] %s81
      %s83 = sshll.u32 %s1, 4
      %s84 = int_to_ptr.hbm [resolvable:$true] %s83
      %86 = dma.vmem_to_hbm [thread:$0]  %s82, 256, %s84, [#allocation3]
    $region9: #{tpu_custom_call.1} parent=1 // pred_fallthru
      _
    // Predicated region
    $region10: #{tpu_custom_call.1} parent=1 // pred_check
      _
    $region11: #{tpu_custom_call.1} parent=1 // pred_check_branch
      %88 = sbr.rel (0) target = $region13
    $region12: #{tpu_custom_call.1} parent=1 // pred_region
      %90 = dma.done [#allocation3], 256
    $region13: #{tpu_custom_call.1} parent=1 // pred_fallthru
      _
    %91 = vsyncpa [#allocation3], 1

</llo_original>
